<compile_context>
chip_gen: v5e
topology: v5e:2x2
jax: 0.10.0
libtpu: 0.0.40
codegen_flags: <defaults>
</compile_context>

<pallas_src>
import math

import jax
import jax.numpy as jnp
from jax import lax
from jax.experimental import pallas as pl
from jax.experimental.pallas import tpu as pltpu

# ----- small, module-consistent config -----
B = 2               # batch
S = 8               # sequence length
H = 32              # hidden_size
NUM_HEADS = 4       # num_attention_heads
HEAD_DIM = H // NUM_HEADS
INTER = 4 * H       # intermediate_size = 4 * hidden_size
LN_EPS = 1e-12
SCALE = 1.0 / math.sqrt(HEAD_DIM)
BS = B * S


def _layer_norm(y, gamma, beta):
    mu = jnp.mean(y, axis=-1, keepdims=True)
    var = jnp.mean((y - mu) * (y - mu), axis=-1, keepdims=True)
    return (y - mu) * lax.rsqrt(var + LN_EPS) * gamma + beta


def _gelu(x):
    # TODO(synk): config.hidden_act assumed "gelu" (tanh approximation); use the
    # erf-exact form if the checkpoint requires it.
    c = math.sqrt(2.0 / math.pi)
    return 0.5 * x * (1.0 + jnp.tanh(c * (x + 0.044715 * x * x * x)))


def anti_layer_kernel(x_ref, mask_ref, wqkv_ref, bqkv_ref, wo_ref, bo_ref,
                      g1_ref, be1_ref, w1_ref, bi1_ref, w2_ref, bi2_ref,
                      g2_ref, be2_ref, out_ref, ctx_ref):
    """Full AntiLayer forward on a [B*S, H] slab, everything resident in VMEM."""
    x = x_ref[...]          # [BS, H] — read once, reused for the residual
    mask = mask_ref[...]    # [BS, BS] combined additive mask (batch-block + key mask)

    # ---- fused QKV projection (pre-transposed weights, scale folded into Q) ----
    qkv = jnp.dot(x, wqkv_ref[...], preferred_element_type=jnp.float32) + bqkv_ref[...]

    # ---- per-head attention, batched over the batch dim via the block mask ----
    for h in range(NUM_HEADS):
        lo = h * HEAD_DIM
        qh = qkv[:, lo:lo + HEAD_DIM]                       # [BS, hd]
        kh = qkv[:, H + lo:H + lo + HEAD_DIM]               # [BS, hd]
        vh = qkv[:, 2 * H + lo:2 * H + lo + HEAD_DIM]       # [BS, hd]

        # scores = qh @ kh^T  (contract last dims; no explicit transpose)
        s = lax.dot_general(qh, kh, (((1,), (1,)), ((), ())),
                            preferred_element_type=jnp.float32)      # [BS, BS]
        s = s + mask
        s = s - jnp.max(s, axis=-1, keepdims=True)
        p = jnp.exp(s)
        p = p * pl.reciprocal(jnp.sum(p, axis=-1, keepdims=True), approx=True)
        # attention-probs dropout: identity in eval mode
        ctx_ref[:, lo:lo + HEAD_DIM] = jnp.dot(
            p, vh, preferred_element_type=jnp.float32)

    # ---- attention output dense + (dropout=id) + residual + LayerNorm ----
    o = jnp.dot(ctx_ref[...], wo_ref[...],
                preferred_element_type=jnp.float32) + bo_ref[...]
    ln1 = _layer_norm(o + x, g1_ref[...], be1_ref[...])

    # ---- feed-forward: intermediate GELU + output dense + residual + LayerNorm ----
    inter = _gelu(jnp.dot(ln1, w1_ref[...],
                          preferred_element_type=jnp.float32) + bi1_ref[...])
    ffn = jnp.dot(inter, w2_ref[...],
                  preferred_element_type=jnp.float32) + bi2_ref[...]
    out_ref[...] = _layer_norm(ffn + ln1, g2_ref[...], be2_ref[...])


def anti_layer(hidden, attn_mask, params):
    """hidden: [B,S,H] f32; attn_mask: [B,1,S] additive; params: PyTorch-layout weights."""
    # Host-side prep: pre-transpose, fuse Q/K/V, fold the 1/sqrt(head_dim) scale.
    wqkv = jnp.concatenate(
        [params["wq"].T * SCALE, params["wk"].T, params["wv"].T], axis=1)   # [H, 3H]
    bqkv = jnp.concatenate(
        [params["bq"] * SCALE, params["bk"], params["bv"]], axis=1)         # [1, 3H]
    wo_t, w1_t, w2_t = params["wo"].T, params["w1"].T, params["w2"].T

    # Combined additive mask over the flattened [B*S] token axis:
    # -1e9 between different batches (block-diagonal) + the user's key mask.
    bid = jnp.arange(BS, dtype=jnp.int32) // S
    block = jnp.where(bid[:, None] == bid[None, :], 0.0, -1e9).astype(jnp.float32)
    mask_full = block + attn_mask.reshape(1, BS)                            # [BS, BS]

    x2 = hidden.reshape(BS, H)
    ins = (x2, mask_full, wqkv, bqkv, wo_t, params["bo"],
           params["gamma1"], params["beta1"], w1_t, params["b1"],
           w2_t, params["b2"], params["gamma2"], params["beta2"])

    vmem = pl.BlockSpec(memory_space=pltpu.MemorySpace.VMEM)
    out = pl.pallas_call(
        anti_layer_kernel,
        out_shape=jax.ShapeDtypeStruct((BS, H), jnp.float32),
        in_specs=[vmem] * len(ins),
        out_specs=vmem,
        scratch_shapes=[pltpu.VMEM((BS, H), jnp.float32)],   # per-head context slab
    )(*ins)
    return out.reshape(B, S, H)


def reference(hidden, attn_mask, p):
    """Pure-JAX reference mirroring the PyTorch AntiLayer forward (eval mode)."""
    q = hidden @ p["wq"].T + p["bq"]
    k = hidden @ p["wk"].T + p["bk"]
    v = hidden @ p["wv"].T + p["bv"]

    def split(t):  # [B,S,H] -> [B,nh,S,hd]
        return t.reshape(B, S, NUM_HEADS, HEAD_DIM).transpose(0, 2, 1, 3)

    qh, kh, vh = split(q), split(k), split(v)
    scores = jnp.einsum("bhqd,bhkd->bhqk", qh, kh) * SCALE
    scores = scores + attn_mask[:, None, :, :]
    probs = jax.nn.softmax(scores, axis=-1)
    ctx = jnp.einsum("bhqk,bhkd->bhqd", probs, vh)
    ctx = ctx.transpose(0, 2, 1, 3).reshape(B, S, H)

    ln1 = _layer_norm(ctx @ p["wo"].T + p["bo"] + hidden, p["gamma1"], p["beta1"])
    inter = _gelu(ln1 @ p["w1"].T + p["b1"])
    return _layer_norm(inter @ p["w2"].T + p["b2"] + ln1, p["gamma2"], p["beta2"])


if __name__ == "__main__":
    key = jax.random.PRNGKey(0)
    ks = jax.random.split(key, 16)
    sc = 0.05

    params = {
        "wq": sc * jax.random.normal(ks[0], (H, H), jnp.float32),
        "bq": sc * jax.random.normal(ks[1], (1, H), jnp.float32),
        "wk": sc * jax.random.normal(ks[2], (H, H), jnp.float32),
        "bk": sc * jax.random.normal(ks[3], (1, H), jnp.float32),
        "wv": sc * jax.random.normal(ks[4], (H, H), jnp.float32),
        "bv": sc * jax.random.normal(ks[5], (1, H), jnp.float32),
        "wo": sc * jax.random.normal(ks[6], (H, H), jnp.float32),
        "bo": sc * jax.random.normal(ks[7], (1, H), jnp.float32),
        "gamma1": 1.0 + sc * jax.random.normal(ks[8], (1, H), jnp.float32),
        "beta1": sc * jax.random.normal(ks[9], (1, H), jnp.float32),
        "w1": sc * jax.random.normal(ks[10], (INTER, H), jnp.float32),
        "b1": sc * jax.random.normal(ks[11], (1, INTER), jnp.float32),
        "w2": sc * jax.random.normal(ks[12], (H, INTER), jnp.float32),
        "b2": sc * jax.random.normal(ks[13], (1, H), jnp.float32),
        "gamma2": 1.0 + sc * jax.random.normal(ks[14], (1, H), jnp.float32),
        "beta2": sc * jax.random.normal(ks[15], (1, H), jnp.float32),
    }

    hidden = jax.random.normal(jax.random.PRNGKey(1), (B, S, H), jnp.float32)
    # additive attention mask: last two key positions masked out for batch 1
    attn_mask = jnp.zeros((B, 1, S), jnp.float32)
    attn_mask = attn_mask.at[1, 0, -2:].set(-1e9)

    out = jax.block_until_ready(anti_layer(hidden, attn_mask, params))
    ref = jax.block_until_ready(reference(hidden, attn_mask, params))

    assert out.shape == (B, S, H)
    err = jnp.max(jnp.abs(out - ref))
    assert jnp.allclose(out, ref, atol=2e-4, rtol=2e-4), f"mismatch vs reference: {err}"

    print("KERNEL_OK")
</pallas_src>

<mosaic_0001>
module attributes {stable_mosaic.version = 11 : i64} {
  func.func @anti_layer_kernel(%arg0: memref<16x32xf32, #tpu.memory_space<vmem>>, %arg1: memref<16x16xf32, #tpu.memory_space<vmem>>, %arg2: memref<32x96xf32, #tpu.memory_space<vmem>>, %arg3: memref<1x96xf32, #tpu.memory_space<vmem>>, %arg4: memref<32x32xf32, #tpu.memory_space<vmem>>, %arg5: memref<1x32xf32, #tpu.memory_space<vmem>>, %arg6: memref<1x32xf32, #tpu.memory_space<vmem>>, %arg7: memref<1x32xf32, #tpu.memory_space<vmem>>, %arg8: memref<32x128xf32, #tpu.memory_space<vmem>>, %arg9: memref<1x128xf32, #tpu.memory_space<vmem>>, %arg10: memref<128x32xf32, #tpu.memory_space<vmem>>, %arg11: memref<1x32xf32, #tpu.memory_space<vmem>>, %arg12: memref<1x32xf32, #tpu.memory_space<vmem>>, %arg13: memref<1x32xf32, #tpu.memory_space<vmem>>, %arg14: memref<16x32xf32, #tpu.memory_space<vmem>>, %arg15: memref<16x32xf32, #tpu.memory_space<vmem>>) attributes {dimension_semantics = [], scalar_prefetch = 0 : i64, scratch_operands = 1 : i64, tpu.core_type = #tpu.core_type<tc>} {
    %c0 = arith.constant 0 : index
    %c0_0 = arith.constant 0 : index
    %0 = vector.load %arg0[%c0, %c0_0] : memref<16x32xf32, #tpu.memory_space<vmem>>, vector<16x32xf32>
    %c0_1 = arith.constant 0 : index
    %c0_2 = arith.constant 0 : index
    %1 = vector.load %arg1[%c0_1, %c0_2] : memref<16x16xf32, #tpu.memory_space<vmem>>, vector<16x16xf32>
    %c0_3 = arith.constant 0 : index
    %c0_4 = arith.constant 0 : index
    %2 = vector.load %arg2[%c0_3, %c0_4] : memref<32x96xf32, #tpu.memory_space<vmem>>, vector<32x96xf32>
    %cst = arith.constant dense<0.000000e+00> : vector<16x96xf32>
    %3 = tpu.matmul %0, %2, %cst {dimension_numbers = #tpu.dot_dimension_numbers<[1], [0], [0], [1], [0, 0, 1, 1], [], []>} : vector<16x32xf32>, vector<32x96xf32>, vector<16x96xf32> -> vector<16x96xf32>
    %c0_5 = arith.constant 0 : index
    %c0_6 = arith.constant 0 : index
    %4 = vector.load %arg3[%c0_5, %c0_6] : memref<1x96xf32, #tpu.memory_space<vmem>>, vector<1x96xf32>
    %5 = vector.broadcast %4 : vector<1x96xf32> to vector<16x96xf32>
    %6 = arith.addf %3, %5 : vector<16x96xf32>
    %7 = vector.extract_strided_slice %6 {offsets = [0, 0], sizes = [16, 8], strides = [1, 1]} : vector<16x96xf32> to vector<16x8xf32>
    %8 = vector.extract_strided_slice %6 {offsets = [0, 32], sizes = [16, 8], strides = [1, 1]} : vector<16x96xf32> to vector<16x8xf32>
    %9 = vector.extract_strided_slice %6 {offsets = [0, 64], sizes = [16, 8], strides = [1, 1]} : vector<16x96xf32> to vector<16x8xf32>
    %cst_7 = arith.constant dense<0.000000e+00> : vector<16x16xf32>
    %10 = tpu.matmul %7, %8, %cst_7 {dimension_numbers = #tpu.dot_dimension_numbers<[1], [1], [0], [0], [0, 0, 1, 0], [], []>} : vector<16x8xf32>, vector<16x8xf32>, vector<16x16xf32> -> vector<16x16xf32>
    %11 = arith.addf %10, %1 : vector<16x16xf32>
    %cst_8 = arith.constant dense<0xFF800000> : vector<16xf32>
    %12 = vector.multi_reduction <maximumf>, %11, %cst_8 [1] : vector<16x16xf32> to vector<16xf32>
    %13 = vector.shape_cast %12 : vector<16xf32> to vector<16x1xf32>
    %14 = vector.broadcast %13 : vector<16x1xf32> to vector<16x16xf32>
    %15 = arith.subf %11, %14 : vector<16x16xf32>
    %16 = math.exp %15 : vector<16x16xf32>
    %cst_9 = arith.constant dense<0.000000e+00> : vector<16xf32>
    %17 = vector.multi_reduction <add>, %16, %cst_9 [1] : vector<16x16xf32> to vector<16xf32>
    %18 = vector.shape_cast %17 : vector<16xf32> to vector<16x1xf32>
    %19 = tpu.reciprocal %18 {approx = true} : vector<16x1xf32> -> vector<16x1xf32>
    %20 = vector.broadcast %19 : vector<16x1xf32> to vector<16x16xf32>
    %21 = arith.mulf %16, %20 : vector<16x16xf32>
    %cst_10 = arith.constant dense<0.000000e+00> : vector<16x8xf32>
    %22 = tpu.matmul %21, %9, %cst_10 {dimension_numbers = #tpu.dot_dimension_numbers<[1], [0], [0], [1], [0, 0, 1, 1], [], []>} : vector<16x16xf32>, vector<16x8xf32>, vector<16x8xf32> -> vector<16x8xf32>
    %c0_11 = arith.constant 0 : index
    %c0_12 = arith.constant 0 : index
    %23 = vector.load %arg15[%c0_11, %c0_12] : memref<16x32xf32, #tpu.memory_space<vmem>>, vector<16x8xf32>
    tpu.vector_store %arg15[%c0_11, %c0_12], %22 {strides = array<i32>} : memref<16x32xf32, #tpu.memory_space<vmem>>, vector<16x8xf32>,
    %24 = vector.extract_strided_slice %6 {offsets = [0, 8], sizes = [16, 8], strides = [1, 1]} : vector<16x96xf32> to vector<16x8xf32>
    %25 = vector.extract_strided_slice %6 {offsets = [0, 40], sizes = [16, 8], strides = [1, 1]} : vector<16x96xf32> to vector<16x8xf32>
    %26 = vector.extract_strided_slice %6 {offsets = [0, 72], sizes = [16, 8], strides = [1, 1]} : vector<16x96xf32> to vector<16x8xf32>
    %cst_13 = arith.constant dense<0.000000e+00> : vector<16x16xf32>
    %27 = tpu.matmul %24, %25, %cst_13 {dimension_numbers = #tpu.dot_dimension_numbers<[1], [1], [0], [0], [0, 0, 1, 0], [], []>} : vector<16x8xf32>, vector<16x8xf32>, vector<16x16xf32> -> vector<16x16xf32>
    %28 = arith.addf %27, %1 : vector<16x16xf32>
    %cst_14 = arith.constant dense<0xFF800000> : vector<16xf32>
    %29 = vector.multi_reduction <maximumf>, %28, %cst_14 [1] : vector<16x16xf32> to vector<16xf32>
    %30 = vector.shape_cast %29 : vector<16xf32> to vector<16x1xf32>
    %31 = vector.broadcast %30 : vector<16x1xf32> to vector<16x16xf32>
    %32 = arith.subf %28, %31 : vector<16x16xf32>
    %33 = math.exp %32 : vector<16x16xf32>
    %cst_15 = arith.constant dense<0.000000e+00> : vector<16xf32>
    %34 = vector.multi_reduction <add>, %33, %cst_15 [1] : vector<16x16xf32> to vector<16xf32>
    %35 = vector.shape_cast %34 : vector<16xf32> to vector<16x1xf32>
    %36 = tpu.reciprocal %35 {approx = true} : vector<16x1xf32> -> vector<16x1xf32>
    %37 = vector.broadcast %36 : vector<16x1xf32> to vector<16x16xf32>
    %38 = arith.mulf %33, %37 : vector<16x16xf32>
    %cst_16 = arith.constant dense<0.000000e+00> : vector<16x8xf32>
    %39 = tpu.matmul %38, %26, %cst_16 {dimension_numbers = #tpu.dot_dimension_numbers<[1], [0], [0], [1], [0, 0, 1, 1], [], []>} : vector<16x16xf32>, vector<16x8xf32>, vector<16x8xf32> -> vector<16x8xf32>
    %c0_17 = arith.constant 0 : index
    %c8 = arith.constant 8 : index
    %40 = vector.load %arg15[%c0_17, %c8] : memref<16x32xf32, #tpu.memory_space<vmem>>, vector<16x8xf32>
    tpu.vector_store %arg15[%c0_17, %c8], %39 {strides = array<i32>} : memref<16x32xf32, #tpu.memory_space<vmem>>, vector<16x8xf32>,
    %41 = vector.extract_strided_slice %6 {offsets = [0, 16], sizes = [16, 8], strides = [1, 1]} : vector<16x96xf32> to vector<16x8xf32>
    %42 = vector.extract_strided_slice %6 {offsets = [0, 48], sizes = [16, 8], strides = [1, 1]} : vector<16x96xf32> to vector<16x8xf32>
    %43 = vector.extract_strided_slice %6 {offsets = [0, 80], sizes = [16, 8], strides = [1, 1]} : vector<16x96xf32> to vector<16x8xf32>
    %cst_18 = arith.constant dense<0.000000e+00> : vector<16x16xf32>
    %44 = tpu.matmul %41, %42, %cst_18 {dimension_numbers = #tpu.dot_dimension_numbers<[1], [1], [0], [0], [0, 0, 1, 0], [], []>} : vector<16x8xf32>, vector<16x8xf32>, vector<16x16xf32> -> vector<16x16xf32>
    %45 = arith.addf %44, %1 : vector<16x16xf32>
    %cst_19 = arith.constant dense<0xFF800000> : vector<16xf32>
    %46 = vector.multi_reduction <maximumf>, %45, %cst_19 [1] : vector<16x16xf32> to vector<16xf32>
    %47 = vector.shape_cast %46 : vector<16xf32> to vector<16x1xf32>
    %48 = vector.broadcast %47 : vector<16x1xf32> to vector<16x16xf32>
    %49 = arith.subf %45, %48 : vector<16x16xf32>
    %50 = math.exp %49 : vector<16x16xf32>
    %cst_20 = arith.constant dense<0.000000e+00> : vector<16xf32>
    %51 = vector.multi_reduction <add>, %50, %cst_20 [1] : vector<16x16xf32> to vector<16xf32>
    %52 = vector.shape_cast %51 : vector<16xf32> to vector<16x1xf32>
    %53 = tpu.reciprocal %52 {approx = true} : vector<16x1xf32> -> vector<16x1xf32>
    %54 = vector.broadcast %53 : vector<16x1xf32> to vector<16x16xf32>
    %55 = arith.mulf %50, %54 : vector<16x16xf32>
    %cst_21 = arith.constant dense<0.000000e+00> : vector<16x8xf32>
    %56 = tpu.matmul %55, %43, %cst_21 {dimension_numbers = #tpu.dot_dimension_numbers<[1], [0], [0], [1], [0, 0, 1, 1], [], []>} : vector<16x16xf32>, vector<16x8xf32>, vector<16x8xf32> -> vector<16x8xf32>
    %c0_22 = arith.constant 0 : index
    %c16 = arith.constant 16 : index
    %57 = vector.load %arg15[%c0_22, %c16] : memref<16x32xf32, #tpu.memory_space<vmem>>, vector<16x8xf32>
    tpu.vector_store %arg15[%c0_22, %c16], %56 {strides = array<i32>} : memref<16x32xf32, #tpu.memory_space<vmem>>, vector<16x8xf32>,
    %58 = vector.extract_strided_slice %6 {offsets = [0, 24], sizes = [16, 8], strides = [1, 1]} : vector<16x96xf32> to vector<16x8xf32>
    %59 = vector.extract_strided_slice %6 {offsets = [0, 56], sizes = [16, 8], strides = [1, 1]} : vector<16x96xf32> to vector<16x8xf32>
    %60 = vector.extract_strided_slice %6 {offsets = [0, 88], sizes = [16, 8], strides = [1, 1]} : vector<16x96xf32> to vector<16x8xf32>
    %cst_23 = arith.constant dense<0.000000e+00> : vector<16x16xf32>
    %61 = tpu.matmul %58, %59, %cst_23 {dimension_numbers = #tpu.dot_dimension_numbers<[1], [1], [0], [0], [0, 0, 1, 0], [], []>} : vector<16x8xf32>, vector<16x8xf32>, vector<16x16xf32> -> vector<16x16xf32>
    %62 = arith.addf %61, %1 : vector<16x16xf32>
    %cst_24 = arith.constant dense<0xFF800000> : vector<16xf32>
    %63 = vector.multi_reduction <maximumf>, %62, %cst_24 [1] : vector<16x16xf32> to vector<16xf32>
    %64 = vector.shape_cast %63 : vector<16xf32> to vector<16x1xf32>
    %65 = vector.broadcast %64 : vector<16x1xf32> to vector<16x16xf32>
    %66 = arith.subf %62, %65 : vector<16x16xf32>
    %67 = math.exp %66 : vector<16x16xf32>
    %cst_25 = arith.constant dense<0.000000e+00> : vector<16xf32>
    %68 = vector.multi_reduction <add>, %67, %cst_25 [1] : vector<16x16xf32> to vector<16xf32>
    %69 = vector.shape_cast %68 : vector<16xf32> to vector<16x1xf32>
    %70 = tpu.reciprocal %69 {approx = true} : vector<16x1xf32> -> vector<16x1xf32>
    %71 = vector.broadcast %70 : vector<16x1xf32> to vector<16x16xf32>
    %72 = arith.mulf %67, %71 : vector<16x16xf32>
    %cst_26 = arith.constant dense<0.000000e+00> : vector<16x8xf32>
    %73 = tpu.matmul %72, %60, %cst_26 {dimension_numbers = #tpu.dot_dimension_numbers<[1], [0], [0], [1], [0, 0, 1, 1], [], []>} : vector<16x16xf32>, vector<16x8xf32>, vector<16x8xf32> -> vector<16x8xf32>
    %c0_27 = arith.constant 0 : index
    %c24 = arith.constant 24 : index
    %74 = vector.load %arg15[%c0_27, %c24] : memref<16x32xf32, #tpu.memory_space<vmem>>, vector<16x8xf32>
    tpu.vector_store %arg15[%c0_27, %c24], %73 {strides = array<i32>} : memref<16x32xf32, #tpu.memory_space<vmem>>, vector<16x8xf32>,
    %c0_28 = arith.constant 0 : index
    %c0_29 = arith.constant 0 : index
    %75 = vector.load %arg15[%c0_28, %c0_29] : memref<16x32xf32, #tpu.memory_space<vmem>>, vector<16x32xf32>
    %c0_30 = arith.constant 0 : index
    %c0_31 = arith.constant 0 : index
    %76 = vector.load %arg4[%c0_30, %c0_31] : memref<32x32xf32, #tpu.memory_space<vmem>>, vector<32x32xf32>
    %cst_32 = arith.constant dense<0.000000e+00> : vector<16x32xf32>
    %77 = tpu.matmul %75, %76, %cst_32 {dimension_numbers = #tpu.dot_dimension_numbers<[1], [0], [0], [1], [0, 0, 1, 1], [], []>} : vector<16x32xf32>, vector<32x32xf32>, vector<16x32xf32> -> vector<16x32xf32>
    %c0_33 = arith.constant 0 : index
    %c0_34 = arith.constant 0 : index
    %78 = vector.load %arg5[%c0_33, %c0_34] : memref<1x32xf32, #tpu.memory_space<vmem>>, vector<1x32xf32>
    %79 = vector.broadcast %78 : vector<1x32xf32> to vector<16x32xf32>
    %80 = arith.addf %77, %79 : vector<16x32xf32>
    %81 = arith.addf %80, %0 : vector<16x32xf32>
    %c0_35 = arith.constant 0 : index
    %c0_36 = arith.constant 0 : index
    %82 = vector.load %arg6[%c0_35, %c0_36] : memref<1x32xf32, #tpu.memory_space<vmem>>, vector<1x32xf32>
    %c0_37 = arith.constant 0 : index
    %c0_38 = arith.constant 0 : index
    %83 = vector.load %arg7[%c0_37, %c0_38] : memref<1x32xf32, #tpu.memory_space<vmem>>, vector<1x32xf32>
    %cst_39 = arith.constant dense<0.000000e+00> : vector<16xf32>
    %84 = vector.multi_reduction <add>, %81, %cst_39 [1] : vector<16x32xf32> to vector<16xf32>
    %85 = vector.shape_cast %84 : vector<16xf32> to vector<16x1xf32>
    %cst_40 = arith.constant 3.200000e+01 : f32
    %86 = vector.broadcast %cst_40 : f32 to vector<16x1xf32>
    %87 = arith.divf %85, %86 : vector<16x1xf32>
    %88 = vector.broadcast %87 : vector<16x1xf32> to vector<16x32xf32>
    %89 = arith.subf %81, %88 : vector<16x32xf32>
    %90 = vector.broadcast %87 : vector<16x1xf32> to vector<16x32xf32>
    %91 = arith.subf %81, %90 : vector<16x32xf32>
    %92 = arith.mulf %89, %91 : vector<16x32xf32>
    %cst_41 = arith.constant dense<0.000000e+00> : vector<16xf32>
    %93 = vector.multi_reduction <add>, %92, %cst_41 [1] : vector<16x32xf32> to vector<16xf32>
    %94 = vector.shape_cast %93 : vector<16xf32> to vector<16x1xf32>
    %cst_42 = arith.constant 3.200000e+01 : f32
    %95 = vector.broadcast %cst_42 : f32 to vector<16x1xf32>
    %96 = arith.divf %94, %95 : vector<16x1xf32>
    %97 = vector.broadcast %87 : vector<16x1xf32> to vector<16x32xf32>
    %98 = arith.subf %81, %97 : vector<16x32xf32>
    %cst_43 = arith.constant 9.99999996E-13 : f32
    %99 = vector.broadcast %cst_43 : f32 to vector<16x1xf32>
    %100 = arith.addf %96, %99 : vector<16x1xf32>
    %101 = math.rsqrt %100 : vector<16x1xf32>
    %102 = vector.broadcast %101 : vector<16x1xf32> to vector<16x32xf32>
    %103 = arith.mulf %98, %102 : vector<16x32xf32>
    %104 = vector.broadcast %82 : vector<1x32xf32> to vector<16x32xf32>
    %105 = arith.mulf %103, %104 : vector<16x32xf32>
    %106 = vector.broadcast %83 : vector<1x32xf32> to vector<16x32xf32>
    %107 = arith.addf %105, %106 : vector<16x32xf32>
    %c0_44 = arith.constant 0 : index
    %c0_45 = arith.constant 0 : index
    %108 = vector.load %arg8[%c0_44, %c0_45] : memref<32x128xf32, #tpu.memory_space<vmem>>, vector<32x128xf32>
    %cst_46 = arith.constant dense<0.000000e+00> : vector<16x128xf32>
    %109 = tpu.matmul %107, %108, %cst_46 {dimension_numbers = #tpu.dot_dimension_numbers<[1], [0], [0], [1], [0, 0, 1, 1], [], []>} : vector<16x32xf32>, vector<32x128xf32>, vector<16x128xf32> -> vector<16x128xf32>
    %c0_47 = arith.constant 0 : index
    %c0_48 = arith.constant 0 : index
    %110 = vector.load %arg9[%c0_47, %c0_48] : memref<1x128xf32, #tpu.memory_space<vmem>>, vector<1x128xf32>
    %111 = vector.broadcast %110 : vector<1x128xf32> to vector<16x128xf32>
    %112 = arith.addf %109, %111 : vector<16x128xf32>
    %cst_49 = arith.constant 5.000000e-01 : f32
    %113 = vector.broadcast %cst_49 : f32 to vector<16x128xf32>
    %114 = arith.mulf %113, %112 : vector<16x128xf32>
    %cst_50 = arith.constant 4.471500e-02 : f32
    %115 = vector.broadcast %cst_50 : f32 to vector<16x128xf32>
    %116 = arith.mulf %115, %112 : vector<16x128xf32>
    %117 = arith.mulf %116, %112 : vector<16x128xf32>
    %118 = arith.mulf %117, %112 : vector<16x128xf32>
    %119 = arith.addf %112, %118 : vector<16x128xf32>
    %cst_51 = arith.constant 0.797884583 : f32
    %120 = vector.broadcast %cst_51 : f32 to vector<16x128xf32>
    %121 = arith.mulf %120, %119 : vector<16x128xf32>
    %122 = math.tanh %121 : vector<16x128xf32>
    %cst_52 = arith.constant 1.000000e+00 : f32
    %123 = vector.broadcast %cst_52 : f32 to vector<16x128xf32>
    %124 = arith.addf %123, %122 : vector<16x128xf32>
    %125 = arith.mulf %114, %124 : vector<16x128xf32>
    %c0_53 = arith.constant 0 : index
    %c0_54 = arith.constant 0 : index
    %126 = vector.load %arg10[%c0_53, %c0_54] : memref<128x32xf32, #tpu.memory_space<vmem>>, vector<128x32xf32>
    %cst_55 = arith.constant dense<0.000000e+00> : vector<16x32xf32>
    %127 = tpu.matmul %125, %126, %cst_55 {dimension_numbers = #tpu.dot_dimension_numbers<[1], [0], [0], [1], [0, 0, 1, 1], [], []>} : vector<16x128xf32>, vector<128x32xf32>, vector<16x32xf32> -> vector<16x32xf32>
    %c0_56 = arith.constant 0 : index
    %c0_57 = arith.constant 0 : index
    %128 = vector.load %arg11[%c0_56, %c0_57] : memref<1x32xf32, #tpu.memory_space<vmem>>, vector<1x32xf32>
    %129 = vector.broadcast %128 : vector<1x32xf32> to vector<16x32xf32>
    %130 = arith.addf %127, %129 : vector<16x32xf32>
    %131 = arith.addf %130, %107 : vector<16x32xf32>
    %c0_58 = arith.constant 0 : index
    %c0_59 = arith.constant 0 : index
    %132 = vector.load %arg12[%c0_58, %c0_59] : memref<1x32xf32, #tpu.memory_space<vmem>>, vector<1x32xf32>
    %c0_60 = arith.constant 0 : index
    %c0_61 = arith.constant 0 : index
    %133 = vector.load %arg13[%c0_60, %c0_61] : memref<1x32xf32, #tpu.memory_space<vmem>>, vector<1x32xf32>
    %cst_62 = arith.constant dense<0.000000e+00> : vector<16xf32>
    %134 = vector.multi_reduction <add>, %131, %cst_62 [1] : vector<16x32xf32> to vector<16xf32>
    %135 = vector.shape_cast %134 : vector<16xf32> to vector<16x1xf32>
    %cst_63 = arith.constant 3.200000e+01 : f32
    %136 = vector.broadcast %cst_63 : f32 to vector<16x1xf32>
    %137 = arith.divf %135, %136 : vector<16x1xf32>
    %138 = vector.broadcast %137 : vector<16x1xf32> to vector<16x32xf32>
    %139 = arith.subf %131, %138 : vector<16x32xf32>
    %140 = vector.broadcast %137 : vector<16x1xf32> to vector<16x32xf32>
    %141 = arith.subf %131, %140 : vector<16x32xf32>
    %142 = arith.mulf %139, %141 : vector<16x32xf32>
    %cst_64 = arith.constant dense<0.000000e+00> : vector<16xf32>
    %143 = vector.multi_reduction <add>, %142, %cst_64 [1] : vector<16x32xf32> to vector<16xf32>
    %144 = vector.shape_cast %143 : vector<16xf32> to vector<16x1xf32>
    %cst_65 = arith.constant 3.200000e+01 : f32
    %145 = vector.broadcast %cst_65 : f32 to vector<16x1xf32>
    %146 = arith.divf %144, %145 : vector<16x1xf32>
    %147 = vector.broadcast %137 : vector<16x1xf32> to vector<16x32xf32>
    %148 = arith.subf %131, %147 : vector<16x32xf32>
    %cst_66 = arith.constant 9.99999996E-13 : f32
    %149 = vector.broadcast %cst_66 : f32 to vector<16x1xf32>
    %150 = arith.addf %146, %149 : vector<16x1xf32>
    %151 = math.rsqrt %150 : vector<16x1xf32>
    %152 = vector.broadcast %151 : vector<16x1xf32> to vector<16x32xf32>
    %153 = arith.mulf %148, %152 : vector<16x32xf32>
    %154 = vector.broadcast %132 : vector<1x32xf32> to vector<16x32xf32>
    %155 = arith.mulf %153, %154 : vector<16x32xf32>
    %156 = vector.broadcast %133 : vector<1x32xf32> to vector<16x32xf32>
    %157 = arith.addf %155, %156 : vector<16x32xf32>
    %c0_67 = arith.constant 0 : index
    %c0_68 = arith.constant 0 : index
    %158 = vector.load %arg14[%c0_67, %c0_68] : memref<16x32xf32, #tpu.memory_space<vmem>>, vector<16x32xf32>
    tpu.vector_store %arg14[%c0_67, %c0_68], %157 {strides = array<i32>} : memref<16x32xf32, #tpu.memory_space<vmem>>, vector<16x32xf32>,
    return
  }
}

</mosaic_0001>

<llo_original>
// kernel: tpu_custom_call.1
$region0: #{tpu_custom_call.1}
  #allocation0 [shape = 'u32[]', space=smem, size = 0x4, offset = 0x4, fixed_abs, tag = 'smem constant byte address 0x4 - core index']
  #allocation1 [shape = 'u32[72,128]{1,0:T(1,128)}', space=vmem, size = 0x9000, scoped, tag = 'internal scratch']
  #allocation2 [shape = 'f32[16,32]{1,0:T(8,128)}', space=vmem, size = 0x2000, scoped, tag = 'scratch operand']
  %s0 = inlined_call_operand.vmem [shape: f32[16,32], index: 0, kind: input, shape index: {}]
  %s1 = inlined_call_operand.vmem [shape: f32[16,16], index: 1, kind: input, shape index: {}]
  %s2 = inlined_call_operand.vmem [shape: f32[32,96], index: 2, kind: input, shape index: {}]
  %s3 = inlined_call_operand.vmem [shape: f32[1,96], index: 3, kind: input, shape index: {}]
  %s4 = inlined_call_operand.vmem [shape: f32[32,32], index: 4, kind: input, shape index: {}]
  %s5 = inlined_call_operand.vmem [shape: f32[1,32], index: 5, kind: input, shape index: {}]
  %s6 = inlined_call_operand.vmem [shape: f32[1,32], index: 6, kind: input, shape index: {}]
  %s7 = inlined_call_operand.vmem [shape: f32[1,32], index: 7, kind: input, shape index: {}]
  %s8 = inlined_call_operand.vmem [shape: f32[32,128], index: 8, kind: input, shape index: {}]
  %s9 = inlined_call_operand.vmem [shape: f32[1,128], index: 9, kind: input, shape index: {}]
  %s10 = inlined_call_operand.vmem [shape: f32[128,32], index: 10, kind: input, shape index: {}]
  %s11 = inlined_call_operand.vmem [shape: f32[1,32], index: 11, kind: input, shape index: {}]
  %s12 = inlined_call_operand.vmem [shape: f32[1,32], index: 12, kind: input, shape index: {}]
  %s13 = inlined_call_operand.vmem [shape: f32[1,32], index: 13, kind: input, shape index: {}]
  %s14 = inlined_call_operand.hbm [shape: f32[16,32], index: 14, kind: output, shape index: {}]
  %s15 = sld [smem:[#allocation0]]
  $region66: #{tpu_custom_call.1} parent=0
    _
  %s17 = ssub.s32 1, %s15
  %s18 = scalar_select 0, %s17, %s15
  $region1: #{tpu_custom_call.1} parent=0
    #allocation3 [shape = 'u8[8192]{0}', space=vmem, size = 0x2000, scoped, tag = 'output window, operand 0, single buffered']
    #allocation4 [shape = 's32[1]{0}', space=sflag, size = 0x4, scoped, tag = 'scoped memory for tpu_custom_call.1']
    %19 = vsyncpa [#allocation4], 0
    // Predicated region
    $region2: #{tpu_custom_call.1} parent=1 // pred_check
      _
    $region3: #{tpu_custom_call.1} parent=1 // pred_check_branch
      %21 = sbr.rel (0) target = $region5
    $region4: #{tpu_custom_call.1} parent=1 // pred_region
      _
    $region5: #{tpu_custom_call.1} parent=1 // pred_fallthru
      _
    // Predicated region
    $region6: #{tpu_custom_call.1} parent=1 // pred_check
      _
    $region7: #{tpu_custom_call.1} parent=1 // pred_check_branch
      %23 = sbr.rel (0) target = $region9
    $region8: #{tpu_custom_call.1} parent=1 // pred_region
      _
    $region9: #{tpu_custom_call.1} parent=1 // pred_fallthru
      _
    // Predicated region
    $region10: #{tpu_custom_call.1} parent=1 // pred_check
      _
    $region11: #{tpu_custom_call.1} parent=1 // pred_check_branch
      %25 = sbr.rel (0) target = $region13
    $region12: #{tpu_custom_call.1} parent=1 // pred_region
      _
    $region13: #{tpu_custom_call.1} parent=1 // pred_fallthru
      _
    // Predicated region
    $region14: #{tpu_custom_call.1} parent=1 // pred_check
      _
    $region15: #{tpu_custom_call.1} parent=1 // pred_check_branch
      %27 = sbr.rel (0) target = $region17
    $region16: #{tpu_custom_call.1} parent=1 // pred_region
      _
    $region17: #{tpu_custom_call.1} parent=1 // pred_fallthru
      _
    // Predicated region
    $region18: #{tpu_custom_call.1} parent=1 // pred_check
      _
    $region19: #{tpu_custom_call.1} parent=1 // pred_check_branch
      %29 = sbr.rel (0) target = $region21
    $region20: #{tpu_custom_call.1} parent=1 // pred_region
      _
    $region21: #{tpu_custom_call.1} parent=1 // pred_fallthru
      _
    // Predicated region
    $region22: #{tpu_custom_call.1} parent=1 // pred_check
      _
    $region23: #{tpu_custom_call.1} parent=1 // pred_check_branch
      %31 = sbr.rel (0) target = $region25
    $region24: #{tpu_custom_call.1} parent=1 // pred_region
      _
    $region25: #{tpu_custom_call.1} parent=1 // pred_fallthru
      _
    // Predicated region
    $region26: #{tpu_custom_call.1} parent=1 // pred_check
      _
    $region27: #{tpu_custom_call.1} parent=1 // pred_check_branch
      %33 = sbr.rel (0) target = $region29
    $region28: #{tpu_custom_call.1} parent=1 // pred_region
      _
    $region29: #{tpu_custom_call.1} parent=1 // pred_fallthru
      _
    // Predicated region
    $region30: #{tpu_custom_call.1} parent=1 // pred_check
      _
    $region31: #{tpu_custom_call.1} parent=1 // pred_check_branch
      %35 = sbr.rel (0) target = $region33
    $region32: #{tpu_custom_call.1} parent=1 // pred_region
      _
    $region33: #{tpu_custom_call.1} parent=1 // pred_fallthru
      _
    // Predicated region
    $region34: #{tpu_custom_call.1} parent=1 // pred_check
      _
    $region35: #{tpu_custom_call.1} parent=1 // pred_check_branch
      %37 = sbr.rel (0) target = $region37
    $region36: #{tpu_custom_call.1} parent=1 // pred_region
      _
    $region37: #{tpu_custom_call.1} parent=1 // pred_fallthru
      _
    // Predicated region
    $region38: #{tpu_custom_call.1} parent=1 // pred_check
      _
    $region39: #{tpu_custom_call.1} parent=1 // pred_check_branch
      %39 = sbr.rel (0) target = $region41
    $region40: #{tpu_custom_call.1} parent=1 // pred_region
      _
    $region41: #{tpu_custom_call.1} parent=1 // pred_fallthru
      _
    // Predicated region
    $region42: #{tpu_custom_call.1} parent=1 // pred_check
      _
    $region43: #{tpu_custom_call.1} parent=1 // pred_check_branch
      %41 = sbr.rel (0) target = $region45
    $region44: #{tpu_custom_call.1} parent=1 // pred_region
      _
    $region45: #{tpu_custom_call.1} parent=1 // pred_fallthru
      _
    // Predicated region
    $region46: #{tpu_custom_call.1} parent=1 // pred_check
      _
    $region47: #{tpu_custom_call.1} parent=1 // pred_check_branch
      %43 = sbr.rel (0) target = $region49
    $region48: #{tpu_custom_call.1} parent=1 // pred_region
      _
    $region49: #{tpu_custom_call.1} parent=1 // pred_fallthru
      _
    // Predicated region
    $region50: #{tpu_custom_call.1} parent=1 // pred_check
      _
    $region51: #{tpu_custom_call.1} parent=1 // pred_check_branch
      %45 = sbr.rel (0) target = $region53
    $region52: #{tpu_custom_call.1} parent=1 // pred_region
      _
    $region53: #{tpu_custom_call.1} parent=1 // pred_fallthru
      _
    // Predicated region
    $region54: #{tpu_custom_call.1} parent=1 // pred_check
      _
    $region55: #{tpu_custom_call.1} parent=1 // pred_check_branch
      %47 = sbr.rel (0) target = $region57
    $region56: #{tpu_custom_call.1} parent=1 // pred_region
      _
    $region57: #{tpu_custom_call.1} parent=1 // pred_fallthru
      _
    %v48 = vld [vmem:[%s0] sm:$0xff]
    %v49 = vld [vmem:[%s0 + $0x8] sm:$0xff]
    %v50 = vld [vmem:[%s1] sm:$0xff]
    %v51 = vld [vmem:[%s1 + $0x8] sm:$0xff]
    %v52 = vld [vmem:[%s2] sm:$0xff]
    %v53 = vld [vmem:[%s2 + $0x8] sm:$0xff]
    %v54 = vld [vmem:[%s2 + $0x10] sm:$0xff]
    %v55 = vld [vmem:[%s2 + $0x18] sm:$0xff]
    %v56 = vld [vmem:[%s3] sm:$0x1]
    %v58 = vperm.slane %v56, 0
    %vm60 = vcmask 261120
    %v62 = vsel %vm60, %v48, 0
    %v65 = vsel %vm60, %v49, 0
    %67 = vmatpush.msra.mxu0 0.0
    %68 = vmatpush.msra.mxu0 0.0
    %69 = vmatpush.msra.mxu0 0.0
    %70 = vmatpush.msra.mxu0 0.0
    %71 = vmatpush.msra.mxu0 0.0
    %72 = vmatpush.msra.mxu0 0.0
    %73 = vmatpush.msra.mxu0 0.0
    %74 = vmatpush.msra.mxu0 0.0
    %75 = vmatpush.msra.mxu0 0.0
    %76 = vmatpush.msra.mxu0 0.0
    %77 = vmatpush.msra.mxu0 0.0
    %78 = vmatpush.msra.mxu0 0.0
    %79 = vmatpush.msra.mxu0 %v55
    %80 = vmatpush.msra.mxu0 %v54
    %81 = vmatpush.msra.mxu0 %v53
    %82 = vmatpush.msra.mxu0 %v52
    %83 = vmatmul.f32.gmra.mxu0 %v62
    %v84 = vpop.f32.mrf.mxu0
    %v85 = vadd.f32 %v58, %v84
    %86 = vmatmul.f32.gmra.mxu0 %v65
    %v87 = vpop.f32.mrf.mxu0
    %v88 = vadd.f32 %v58, %v87
    %89 = vdwg.mxu0
    %92 = vrot.lane.b32.xlu0 %v85, 96
    %v93 = vpop.permute.xlu0 %92
    %94 = vrot.lane.b32.xlu0 %v88, 96
    %v95 = vpop.permute.xlu0 %94
    %vm96 = vcmask 64512
    %v97 = vsel %vm96, %v85, 0
    %v99 = vsel %vm96, %v88, 0
    %v101 = vsel %vm96, %v93, 0
    %v103 = vsel %vm96, %v95, 0
    %105 = vmatpush.xpose.msra.mxu0 0.0
    %106 = vmatpush.xpose.msra.mxu0 0.0
    %107 = vmatpush.xpose.msra.mxu0 0.0
    %108 = vmatpush.xpose.msra.mxu0 0.0
    %109 = vmatpush.xpose.msra.mxu0 0.0
    %110 = vmatpush.xpose.msra.mxu0 0.0
    %111 = vmatpush.xpose.msra.mxu0 0.0
    %112 = vmatpush.xpose.msra.mxu0 0.0
    %113 = vmatpush.xpose.msra.mxu0 0.0
    %114 = vmatpush.xpose.msra.mxu0 0.0
    %115 = vmatpush.xpose.msra.mxu0 0.0
    %116 = vmatpush.xpose.msra.mxu0 0.0
    %117 = vmatpush.xpose.msra.mxu0 0.0
    %118 = vmatpush.xpose.msra.mxu0 0.0
    %119 = vmatpush.xpose.msra.mxu0 %v103
    %120 = vmatpush.xpose.msra.mxu0 %v101
    %121 = vmatmul.f32.gmra.mxu0 %v97
    %v122 = vpop.f32.mrf.mxu0
    %v123 = vadd.f32 %v50, %v122
    %124 = vmatmul.f32.gmra.mxu0 %v99
    %v125 = vpop.f32.mrf.mxu0
    %v126 = vadd.f32 %v51, %v125
    %127 = vdwg.mxu0
    %vm128 = vcmask 130048
    %v129 = vsel %vm128, %v123, -inf
    %130 = vmax.xlane.f32.xlu0 %v129
    %v131 = vpop.xlane.xlu0 %130
    %v132 = vsel %vm128, %v126, -inf
    %133 = vmax.xlane.f32.xlu0 %v132
    %v134 = vpop.xlane.xlu0 %133
    %v135 = vsub.f32 %v123, %v131
    %v136 = vsub.f32 %v126, %v134
    %v137 = vmul.f32 %v135, 1.442695
    %v138 = vpow.pop %v137
    %v139 = vmul.f32 %v136, 1.442695
    %v140 = vpow.pop %v139
    %v141 = vsel %vm128, %v138, 0.0
    %142 = vadd.xlane.f32.xlu0 %v141
    %v143 = vpop.xlane.xlu0 %142
    %v144 = vsel %vm128, %v140, 0.0
    %145 = vadd.xlane.f32.xlu0 %v144
    %v146 = vpop.xlane.xlu0 %145
    %v147 = vrcp.pop %v143
    %v148 = vrcp.pop %v146
    %v149 = vmul.f32 %v138, %v147
    %v150 = vmul.f32 %v140, %v148
    %151 = vrot.lane.b32.xlu0 %v85, 64
    %v152 = vpop.permute.xlu0 %151
    %153 = vrot.lane.b32.xlu0 %v88, 64
    %v154 = vpop.permute.xlu0 %153
    %v158 = vsel %vm128, %v149, 0
    %v161 = vsel %vm128, %v150, 0
    %163 = vmatpush.msra.mxu0 0.0
    %164 = vmatpush.msra.mxu0 0.0
    %165 = vmatpush.msra.mxu0 0.0
    %166 = vmatpush.msra.mxu0 0.0
    %167 = vmatpush.msra.mxu0 0.0
    %168 = vmatpush.msra.mxu0 0.0
    %169 = vmatpush.msra.mxu0 0.0
    %170 = vmatpush.msra.mxu0 0.0
    %171 = vmatpush.msra.mxu0 0.0
    %172 = vmatpush.msra.mxu0 0.0
    %173 = vmatpush.msra.mxu0 0.0
    %174 = vmatpush.msra.mxu0 0.0
    %175 = vmatpush.msra.mxu0 0.0
    %176 = vmatpush.msra.mxu0 0.0
    %177 = vmatpush.msra.mxu0 %v154
    %178 = vmatpush.msra.mxu0 %v152
    %179 = vmatmul.f32.gmra.mxu0 %v158
    %v180 = vpop.f32.mrf.mxu0
    %v181 = vadd.f32 0.0, %v180
    %182 = vmatmul.f32.gmra.mxu0 %v161
    %v183 = vpop.f32.mrf.mxu0
    %v184 = vadd.f32 0.0, %v183
    %185 = vdwg.mxu0
    %186 = vst.msk [vmem:[#allocation2] sm:$0xff] %vm96, %v181
    %187 = vst.msk [vmem:[#allocation2 + $0x8] sm:$0xff] %vm96, %v184
    %188 = vrot.lane.b32.xlu0 %v85, 120
    %v189 = vpop.permute.xlu0 %188
    %190 = vrot.lane.b32.xlu0 %v88, 120
    %v191 = vpop.permute.xlu0 %190
    %192 = vrot.lane.b32.xlu0 %v85, 88
    %v193 = vpop.permute.xlu0 %192
    %194 = vrot.lane.b32.xlu0 %v88, 88
    %v195 = vpop.permute.xlu0 %194
    %v196 = vsel %vm96, %v189, 0
    %v198 = vsel %vm96, %v191, 0
    %v200 = vsel %vm96, %v193, 0
    %v202 = vsel %vm96, %v195, 0
    %204 = vmatpush.xpose.msra.mxu0 0.0
    %205 = vmatpush.xpose.msra.mxu0 0.0
    %206 = vmatpush.xpose.msra.mxu0 0.0
    %207 = vmatpush.xpose.msra.mxu0 0.0
    %208 = vmatpush.xpose.msra.mxu0 0.0
    %209 = vmatpush.xpose.msra.mxu0 0.0
    %210 = vmatpush.xpose.msra.mxu0 0.0
    %211 = vmatpush.xpose.msra.mxu0 0.0
    %212 = vmatpush.xpose.msra.mxu0 0.0
    %213 = vmatpush.xpose.msra.mxu0 0.0
    %214 = vmatpush.xpose.msra.mxu0 0.0
    %215 = vmatpush.xpose.msra.mxu0 0.0
    %216 = vmatpush.xpose.msra.mxu0 0.0
    %217 = vmatpush.xpose.msra.mxu0 0.0
    %218 = vmatpush.xpose.msra.mxu0 %v202
    %219 = vmatpush.xpose.msra.mxu0 %v200
    %220 = vmatmul.f32.gmra.mxu0 %v196
    %v221 = vpop.f32.mrf.mxu0
    %v222 = vadd.f32 %v50, %v221
    %223 = vmatmul.f32.gmra.mxu0 %v198
    %v224 = vpop.f32.mrf.mxu0
    %v225 = vadd.f32 %v51, %v224
    %226 = vdwg.mxu0
    %v227 = vsel %vm128, %v222, -inf
    %228 = vmax.xlane.f32.xlu0 %v227
    %v229 = vpop.xlane.xlu0 %228
    %v230 = vsel %vm128, %v225, -inf
    %231 = vmax.xlane.f32.xlu0 %v230
    %v232 = vpop.xlane.xlu0 %231
    %v233 = vsub.f32 %v222, %v229
    %v234 = vsub.f32 %v225, %v232
    %v235 = vmul.f32 %v233, 1.442695
    %v236 = vpow.pop %v235
    %v237 = vmul.f32 %v234, 1.442695
    %v238 = vpow.pop %v237
    %v239 = vsel %vm128, %v236, 0.0
    %240 = vadd.xlane.f32.xlu0 %v239
    %v241 = vpop.xlane.xlu0 %240
    %v242 = vsel %vm128, %v238, 0.0
    %243 = vadd.xlane.f32.xlu0 %v242
    %v244 = vpop.xlane.xlu0 %243
    %v245 = vrcp.pop %v241
    %v246 = vrcp.pop %v244
    %v247 = vmul.f32 %v236, %v245
    %v248 = vmul.f32 %v238, %v246
    %249 = vrot.lane.b32.xlu0 %v85, 56
    %v250 = vpop.permute.xlu0 %249
    %251 = vrot.lane.b32.xlu0 %v88, 56
    %v252 = vpop.permute.xlu0 %251
    %v256 = vsel %vm128, %v247, 0
    %v259 = vsel %vm128, %v248, 0
    %261 = vmatpush.msra.mxu0 0.0
    %262 = vmatpush.msra.mxu0 0.0
    %263 = vmatpush.msra.mxu0 0.0
    %264 = vmatpush.msra.mxu0 0.0
    %265 = vmatpush.msra.mxu0 0.0
    %266 = vmatpush.msra.mxu0 0.0
    %267 = vmatpush.msra.mxu0 0.0
    %268 = vmatpush.msra.mxu0 0.0
    %269 = vmatpush.msra.mxu0 0.0
    %270 = vmatpush.msra.mxu0 0.0
    %271 = vmatpush.msra.mxu0 0.0
    %272 = vmatpush.msra.mxu0 0.0
    %273 = vmatpush.msra.mxu0 0.0
    %274 = vmatpush.msra.mxu0 0.0
    %275 = vmatpush.msra.mxu0 %v252
    %276 = vmatpush.msra.mxu0 %v250
    %277 = vmatmul.f32.gmra.mxu0 %v256
    %v278 = vpop.f32.mrf.mxu0
    %v279 = vadd.f32 0.0, %v278
    %280 = vmatmul.f32.gmra.mxu0 %v259
    %v281 = vpop.f32.mrf.mxu0
    %v282 = vadd.f32 0.0, %v281
    %283 = vdwg.mxu0
    %286 = vrot.lane.b32.xlu0 %v279, 8
    %v287 = vpop.permute.xlu0 %286
    %288 = vrot.lane.b32.xlu0 %v282, 8
    %v289 = vpop.permute.xlu0 %288
    %vm292 = vcmask 130112
    %293 = vst.msk [vmem:[#allocation2] sm:$0xff] %vm292, %v287
    %294 = vst.msk [vmem:[#allocation2 + $0x8] sm:$0xff] %vm292, %v289
    %295 = vrot.lane.b32.xlu0 %v85, 112
    %v296 = vpop.permute.xlu0 %295
    %297 = vrot.lane.b32.xlu0 %v88, 112
    %v298 = vpop.permute.xlu0 %297
    %299 = vrot.lane.b32.xlu0 %v85, 80
    %v300 = vpop.permute.xlu0 %299
    %301 = vrot.lane.b32.xlu0 %v88, 80
    %v302 = vpop.permute.xlu0 %301
    %v303 = vsel %vm96, %v296, 0
    %v305 = vsel %vm96, %v298, 0
    %v307 = vsel %vm96, %v300, 0
    %v309 = vsel %vm96, %v302, 0
    %311 = vmatpush.xpose.msra.mxu0 0.0
    %312 = vmatpush.xpose.msra.mxu0 0.0
    %313 = vmatpush.xpose.msra.mxu0 0.0
    %314 = vmatpush.xpose.msra.mxu0 0.0
    %315 = vmatpush.xpose.msra.mxu0 0.0
    %316 = vmatpush.xpose.msra.mxu0 0.0
    %317 = vmatpush.xpose.msra.mxu0 0.0
    %318 = vmatpush.xpose.msra.mxu0 0.0
    %319 = vmatpush.xpose.msra.mxu0 0.0
    %320 = vmatpush.xpose.msra.mxu0 0.0
    %321 = vmatpush.xpose.msra.mxu0 0.0
    %322 = vmatpush.xpose.msra.mxu0 0.0
    %323 = vmatpush.xpose.msra.mxu0 0.0
    %324 = vmatpush.xpose.msra.mxu0 0.0
    %325 = vmatpush.xpose.msra.mxu0 %v309
    %326 = vmatpush.xpose.msra.mxu0 %v307
    %327 = vmatmul.f32.gmra.mxu0 %v303
    %v328 = vpop.f32.mrf.mxu0
    %v329 = vadd.f32 %v50, %v328
    %330 = vmatmul.f32.gmra.mxu0 %v305
    %v331 = vpop.f32.mrf.mxu0
    %v332 = vadd.f32 %v51, %v331
    %333 = vdwg.mxu0
    %v334 = vsel %vm128, %v329, -inf
    %335 = vmax.xlane.f32.xlu0 %v334
    %v336 = vpop.xlane.xlu0 %335
    %v337 = vsel %vm128, %v332, -inf
    %338 = vmax.xlane.f32.xlu0 %v337
    %v339 = vpop.xlane.xlu0 %338
    %v340 = vsub.f32 %v329, %v336
    %v341 = vsub.f32 %v332, %v339
    %v342 = vmul.f32 %v340, 1.442695
    %v343 = vpow.pop %v342
    %v344 = vmul.f32 %v341, 1.442695
    %v345 = vpow.pop %v344
    %v346 = vsel %vm128, %v343, 0.0
    %347 = vadd.xlane.f32.xlu0 %v346
    %v348 = vpop.xlane.xlu0 %347
    %v349 = vsel %vm128, %v345, 0.0
    %350 = vadd.xlane.f32.xlu0 %v349
    %v351 = vpop.xlane.xlu0 %350
    %v352 = vrcp.pop %v348
    %v353 = vrcp.pop %v351
    %v354 = vmul.f32 %v343, %v352
    %v355 = vmul.f32 %v345, %v353
    %356 = vrot.lane.b32.xlu0 %v85, 48
    %v357 = vpop.permute.xlu0 %356
    %358 = vrot.lane.b32.xlu0 %v88, 48
    %v359 = vpop.permute.xlu0 %358
    %v363 = vsel %vm128, %v354, 0
    %v366 = vsel %vm128, %v355, 0
    %368 = vmatpush.msra.mxu0 0.0
    %369 = vmatpush.msra.mxu0 0.0
    %370 = vmatpush.msra.mxu0 0.0
    %371 = vmatpush.msra.mxu0 0.0
    %372 = vmatpush.msra.mxu0 0.0
    %373 = vmatpush.msra.mxu0 0.0
    %374 = vmatpush.msra.mxu0 0.0
    %375 = vmatpush.msra.mxu0 0.0
    %376 = vmatpush.msra.mxu0 0.0
    %377 = vmatpush.msra.mxu0 0.0
    %378 = vmatpush.msra.mxu0 0.0
    %379 = vmatpush.msra.mxu0 0.0
    %380 = vmatpush.msra.mxu0 0.0
    %381 = vmatpush.msra.mxu0 0.0
    %382 = vmatpush.msra.mxu0 %v359
    %383 = vmatpush.msra.mxu0 %v357
    %384 = vmatmul.f32.gmra.mxu0 %v363
    %v385 = vpop.f32.mrf.mxu0
    %v386 = vadd.f32 0.0, %v385
    %387 = vmatmul.f32.gmra.mxu0 %v366
    %v388 = vpop.f32.mrf.mxu0
    %v389 = vadd.f32 0.0, %v388
    %390 = vdwg.mxu0
    %393 = vrot.lane.b32.xlu0 %v386, 16
    %v394 = vpop.permute.xlu0 %393
    %395 = vrot.lane.b32.xlu0 %v389, 16
    %v396 = vpop.permute.xlu0 %395
    %vm399 = vcmask 195712
    %400 = vst.msk [vmem:[#allocation2] sm:$0xff] %vm399, %v394
    %401 = vst.msk [vmem:[#allocation2 + $0x8] sm:$0xff] %vm399, %v396
    %402 = vrot.lane.b32.xlu0 %v85, 104
    %v403 = vpop.permute.xlu0 %402
    %404 = vrot.lane.b32.xlu0 %v88, 104
    %v405 = vpop.permute.xlu0 %404
    %406 = vrot.lane.b32.xlu0 %v85, 72
    %v407 = vpop.permute.xlu0 %406
    %408 = vrot.lane.b32.xlu0 %v88, 72
    %v409 = vpop.permute.xlu0 %408
    %v410 = vsel %vm96, %v403, 0
    %v412 = vsel %vm96, %v405, 0
    %v414 = vsel %vm96, %v407, 0
    %v416 = vsel %vm96, %v409, 0
    %418 = vmatpush.xpose.msra.mxu0 0.0
    %419 = vmatpush.xpose.msra.mxu0 0.0
    %420 = vmatpush.xpose.msra.mxu0 0.0
    %421 = vmatpush.xpose.msra.mxu0 0.0
    %422 = vmatpush.xpose.msra.mxu0 0.0
    %423 = vmatpush.xpose.msra.mxu0 0.0
    %424 = vmatpush.xpose.msra.mxu0 0.0
    %425 = vmatpush.xpose.msra.mxu0 0.0
    %426 = vmatpush.xpose.msra.mxu0 0.0
    %427 = vmatpush.xpose.msra.mxu0 0.0
    %428 = vmatpush.xpose.msra.mxu0 0.0
    %429 = vmatpush.xpose.msra.mxu0 0.0
    %430 = vmatpush.xpose.msra.mxu0 0.0
    %431 = vmatpush.xpose.msra.mxu0 0.0
    %432 = vmatpush.xpose.msra.mxu0 %v416
    %433 = vmatpush.xpose.msra.mxu0 %v414
    %434 = vmatmul.f32.gmra.mxu0 %v410
    %v435 = vpop.f32.mrf.mxu0
    %v436 = vadd.f32 %v50, %v435
    %437 = vmatmul.f32.gmra.mxu0 %v412
    %v438 = vpop.f32.mrf.mxu0
    %v439 = vadd.f32 %v51, %v438
    %440 = vdwg.mxu0
    %v441 = vsel %vm128, %v436, -inf
    %442 = vmax.xlane.f32.xlu0 %v441
    %v443 = vpop.xlane.xlu0 %442
    %v444 = vsel %vm128, %v439, -inf
    %445 = vmax.xlane.f32.xlu0 %v444
    %v446 = vpop.xlane.xlu0 %445
    %v447 = vsub.f32 %v436, %v443
    %v448 = vsub.f32 %v439, %v446
    %v449 = vmul.f32 %v447, 1.442695
    %v450 = vpow.pop %v449
    %v451 = vmul.f32 %v448, 1.442695
    %v452 = vpow.pop %v451
    %v453 = vsel %vm128, %v450, 0.0
    %454 = vadd.xlane.f32.xlu0 %v453
    %v455 = vpop.xlane.xlu0 %454
    %v456 = vsel %vm128, %v452, 0.0
    %457 = vadd.xlane.f32.xlu0 %v456
    %v458 = vpop.xlane.xlu0 %457
    %v459 = vrcp.pop %v455
    %v460 = vrcp.pop %v458
    %v461 = vmul.f32 %v450, %v459
    %v462 = vmul.f32 %v452, %v460
    %463 = vrot.lane.b32.xlu0 %v85, 40
    %v464 = vpop.permute.xlu0 %463
    %465 = vrot.lane.b32.xlu0 %v88, 40
    %v466 = vpop.permute.xlu0 %465
    %v470 = vsel %vm128, %v461, 0
    %v473 = vsel %vm128, %v462, 0
    %475 = vmatpush.msra.mxu0 0.0
    %476 = vmatpush.msra.mxu0 0.0
    %477 = vmatpush.msra.mxu0 0.0
    %478 = vmatpush.msra.mxu0 0.0
    %479 = vmatpush.msra.mxu0 0.0
    %480 = vmatpush.msra.mxu0 0.0
    %481 = vmatpush.msra.mxu0 0.0
    %482 = vmatpush.msra.mxu0 0.0
    %483 = vmatpush.msra.mxu0 0.0
    %484 = vmatpush.msra.mxu0 0.0
    %485 = vmatpush.msra.mxu0 0.0
    %486 = vmatpush.msra.mxu0 0.0
    %487 = vmatpush.msra.mxu0 0.0
    %488 = vmatpush.msra.mxu0 0.0
    %489 = vmatpush.msra.mxu0 %v466
    %490 = vmatpush.msra.mxu0 %v464
    %491 = vmatmul.f32.gmra.mxu0 %v470
    %v492 = vpop.f32.mrf.mxu0
    %v493 = vadd.f32 0.0, %v492
    %494 = vmatmul.f32.gmra.mxu0 %v473
    %v495 = vpop.f32.mrf.mxu0
    %v496 = vadd.f32 0.0, %v495
    %497 = vdwg.mxu0
    %500 = vrot.lane.b32.xlu0 %v493, 24
    %v501 = vpop.permute.xlu0 %500
    %502 = vrot.lane.b32.xlu0 %v496, 24
    %v503 = vpop.permute.xlu0 %502
    %vm506 = vcmask 261312
    %507 = vst.msk [vmem:[#allocation2] sm:$0xff] %vm506, %v501
    %508 = vst.msk [vmem:[#allocation2 + $0x8] sm:$0xff] %vm506, %v503
    %v509 = vld [vmem:[#allocation2] sm:$0xff]
    %v510 = vld [vmem:[#allocation2 + $0x8] sm:$0xff]
    %v511 = vld [vmem:[%s4] sm:$0xff]
    %v512 = vld [vmem:[%s4 + $0x8] sm:$0xff]
    %v513 = vld [vmem:[%s4 + $0x10] sm:$0xff]
    %v514 = vld [vmem:[%s4 + $0x18] sm:$0xff]
    %v515 = vld [vmem:[%s5] sm:$0x1]
    %v517 = vperm.slane %v515, 0
    %v520 = vsel %vm60, %v509, 0
    %v523 = vsel %vm60, %v510, 0
    %525 = vmatpush.msra.mxu0 0.0
    %526 = vmatpush.msra.mxu0 0.0
    %527 = vmatpush.msra.mxu0 0.0
    %528 = vmatpush.msra.mxu0 0.0
    %529 = vmatpush.msra.mxu0 0.0
    %530 = vmatpush.msra.mxu0 0.0
    %531 = vmatpush.msra.mxu0 0.0
    %532 = vmatpush.msra.mxu0 0.0
    %533 = vmatpush.msra.mxu0 0.0
    %534 = vmatpush.msra.mxu0 0.0
    %535 = vmatpush.msra.mxu0 0.0
    %536 = vmatpush.msra.mxu0 0.0
    %537 = vmatpush.msra.mxu0 %v514
    %538 = vmatpush.msra.mxu0 %v513
    %539 = vmatpush.msra.mxu0 %v512
    %540 = vmatpush.msra.mxu0 %v511
    %541 = vmatmul.f32.gmra.mxu0 %v520
    %v542 = vpop.f32.mrf.mxu0
    %v543 = vadd.f32 %v517, %v542
    %544 = vmatmul.f32.gmra.mxu0 %v523
    %v545 = vpop.f32.mrf.mxu0
    %v546 = vadd.f32 %v517, %v545
    %547 = vdwg.mxu0
    %v548 = vadd.f32 %v543, %v48
    %v549 = vadd.f32 %v546, %v49
    %v550 = vld [vmem:[%s6] sm:$0x1]
    %v551 = vld [vmem:[%s7] sm:$0x1]
    %v552 = vsel %vm60, %v548, 0.0
    %553 = vadd.xlane.f32.xlu0 %v552
    %v554 = vpop.xlane.xlu0 %553
    %v555 = vsel %vm60, %v549, 0.0
    %556 = vadd.xlane.f32.xlu0 %v555
    %v557 = vpop.xlane.xlu0 %556
    %v558 = vrcp.pop 32.0
    %v559 = vmul.f32 32.0, %v558
    %v560 = vsub.f32 1.0, %v559
    %v561 = vmul.f32 %v558, %v560
    %v562 = vadd.f32 %v558, %v561
    %vm563 = vweird.f32 %v558
    %v564 = vsel %vm563, %v558, %v562
    %v565 = vmul.f32 %v554, %v564
    %v566 = vmul.f32 %v557, %v564
    %v567 = vsub.f32 %v548, %v565
    %v568 = vsub.f32 %v549, %v566
    %v569 = vmul.f32 %v567, %v567
    %v570 = vmul.f32 %v568, %v568
    %v571 = vsel %vm60, %v569, 0.0
    %572 = vadd.xlane.f32.xlu0 %v571
    %v573 = vpop.xlane.xlu0 %572
    %v574 = vsel %vm60, %v570, 0.0
    %575 = vadd.xlane.f32.xlu0 %v574
    %v576 = vpop.xlane.xlu0 %575
    %v577 = vmul.f32 %v573, %v564
    %v578 = vmul.f32 %v576, %v564
    %v579 = vadd.f32 %v577, 1e-12
    %v580 = vadd.f32 %v578, 1e-12
    %v581 = vrsqrt.pop %v579
    %v582 = vmul.f32 %v581, %v579
    %v583 = vmul.f32 %v582, %v581
    %v584 = vmul.f32 0.5, %v583
    %v585 = vsub.f32 1.5, %v584
    %v586 = vmul.f32 %v581, %v585
    %vm587 = vweird.f32 %v579
    %vm588 = vweird.f32 %v581
    %vm589 = vmor %vm587, %vm588
    %v590 = vsel %vm589, %v581, %v586
    %v591 = vrsqrt.pop %v580
    %v592 = vmul.f32 %v591, %v580
    %v593 = vmul.f32 %v592, %v591
    %v594 = vmul.f32 0.5, %v593
    %v595 = vsub.f32 1.5, %v594
    %v596 = vmul.f32 %v591, %v595
    %vm597 = vweird.f32 %v580
    %vm598 = vweird.f32 %v591
    %vm599 = vmor %vm597, %vm598
    %v600 = vsel %vm599, %v591, %v596
    %v601 = vmul.f32 %v567, %v590
    %v602 = vmul.f32 %v568, %v600
    %v604 = vperm.slane %v550, 0
    %v606 = vmul.f32 %v601, %v604
    %v607 = vmul.f32 %v602, %v604
    %v609 = vperm.slane %v551, 0
    %v611 = vadd.f32 %v606, %v609
    %v612 = vadd.f32 %v607, %v609
    %v613 = vld [vmem:[%s8] sm:$0xff]
    %v614 = vld [vmem:[%s8 + $0x8] sm:$0xff]
    %v615 = vld [vmem:[%s8 + $0x10] sm:$0xff]
    %v616 = vld [vmem:[%s8 + $0x18] sm:$0xff]
    %v617 = vld [vmem:[%s9] sm:$0x1]
    %v619 = vperm.slane %v617, 0
    %v622 = vsel %vm60, %v611, 0
    %v625 = vsel %vm60, %v612, 0
    %627 = vmatpush.msra.mxu0 0.0
    %628 = vmatpush.msra.mxu0 0.0
    %629 = vmatpush.msra.mxu0 0.0
    %630 = vmatpush.msra.mxu0 0.0
    %631 = vmatpush.msra.mxu0 0.0
    %632 = vmatpush.msra.mxu0 0.0
    %633 = vmatpush.msra.mxu0 0.0
    %634 = vmatpush.msra.mxu0 0.0
    %635 = vmatpush.msra.mxu0 0.0
    %636 = vmatpush.msra.mxu0 0.0
    %637 = vmatpush.msra.mxu0 0.0
    %638 = vmatpush.msra.mxu0 0.0
    %639 = vmatpush.msra.mxu0 %v616
    %640 = vmatpush.msra.mxu0 %v615
    %641 = vmatpush.msra.mxu0 %v614
    %642 = vmatpush.msra.mxu0 %v613
    %643 = vmatmul.f32.gmra.mxu0 %v622
    %v644 = vpop.f32.mrf.mxu0
    %v645 = vadd.f32 %v619, %v644
    %646 = vmatmul.f32.gmra.mxu0 %v625
    %v647 = vpop.f32.mrf.mxu0
    %v648 = vadd.f32 %v619, %v647
    %649 = vdwg.mxu0
    %v650 = vmul.f32 %v645, 0.5
    %v651 = vmul.f32 %v648, 0.5
    %v652 = vmul.f32 %v645, 0.044715
    %v653 = vmul.f32 %v648, 0.044715
    %v654 = vmul.f32 %v652, %v645
    %v655 = vmul.f32 %v653, %v648
    %v656 = vmul.f32 %v654, %v645
    %v657 = vmul.f32 %v655, %v648
    %v658 = vadd.f32 %v645, %v656
    %v659 = vadd.f32 %v648, %v657
    %v660 = vmul.f32 %v658, 0.7978846
    %v661 = vmul.f32 %v659, 0.7978846
    %v662 = vtanh.pop %v660
    %v663 = vtanh.pop %v661
    %v664 = vadd.f32 %v662, 1.0
    %v665 = vadd.f32 %v663, 1.0
    %v666 = vmul.f32 %v650, %v664
    %v667 = vmul.f32 %v651, %v665
    %v668 = vld [vmem:[%s10] sm:$0xff]
    %v669 = vld [vmem:[%s10 + $0x8] sm:$0xff]
    %v670 = vld [vmem:[%s10 + $0x10] sm:$0xff]
    %v671 = vld [vmem:[%s10 + $0x18] sm:$0xff]
    %v672 = vld [vmem:[%s10 + $0x20] sm:$0xff]
    %v673 = vld [vmem:[%s10 + $0x28] sm:$0xff]
    %v674 = vld [vmem:[%s10 + $0x30] sm:$0xff]
    %v675 = vld [vmem:[%s10 + $0x38] sm:$0xff]
    %v676 = vld [vmem:[%s10 + $0x40] sm:$0xff]
    %v677 = vld [vmem:[%s10 + $0x48] sm:$0xff]
    %v678 = vld [vmem:[%s10 + $0x50] sm:$0xff]
    %v679 = vld [vmem:[%s10 + $0x58] sm:$0xff]
    %v680 = vld [vmem:[%s10 + $0x60] sm:$0xff]
    %v681 = vld [vmem:[%s10 + $0x68] sm:$0xff]
    %v682 = vld [vmem:[%s10 + $0x70] sm:$0xff]
    %v683 = vld [vmem:[%s10 + $0x78] sm:$0xff]
    %v684 = vld [vmem:[%s11] sm:$0x1]
    %v686 = vperm.slane %v684, 0
    %688 = vmatpush.msra.mxu0 %v683
    %689 = vmatpush.msra.mxu0 %v682
    %690 = vmatpush.msra.mxu0 %v681
    %691 = vmatpush.msra.mxu0 %v680
    %692 = vmatpush.msra.mxu0 %v679
    %693 = vmatpush.msra.mxu0 %v678
    %694 = vmatpush.msra.mxu0 %v677
    %695 = vmatpush.msra.mxu0 %v676
    %696 = vmatpush.msra.mxu0 %v675
    %697 = vmatpush.msra.mxu0 %v674
    %698 = vmatpush.msra.mxu0 %v673
    %699 = vmatpush.msra.mxu0 %v672
    %700 = vmatpush.msra.mxu0 %v671
    %701 = vmatpush.msra.mxu0 %v670
    %702 = vmatpush.msra.mxu0 %v669
    %703 = vmatpush.msra.mxu0 %v668
    %704 = vmatmul.f32.gmra.mxu0 %v666
    %v705 = vpop.f32.mrf.mxu0
    %v706 = vadd.f32 %v686, %v705
    %707 = vmatmul.f32.gmra.mxu0 %v667
    %v708 = vpop.f32.mrf.mxu0
    %v709 = vadd.f32 %v686, %v708
    %710 = vdwg.mxu0
    %v711 = vadd.f32 %v706, %v611
    %v712 = vadd.f32 %v709, %v612
    %v713 = vld [vmem:[%s12] sm:$0x1]
    %v714 = vld [vmem:[%s13] sm:$0x1]
    %v715 = vsel %vm60, %v711, 0.0
    %716 = vadd.xlane.f32.xlu0 %v715
    %v717 = vpop.xlane.xlu0 %716
    %v718 = vsel %vm60, %v712, 0.0
    %719 = vadd.xlane.f32.xlu0 %v718
    %v720 = vpop.xlane.xlu0 %719
    %v721 = vmul.f32 %v717, %v564
    %v722 = vmul.f32 %v720, %v564
    %v723 = vsub.f32 %v711, %v721
    %v724 = vsub.f32 %v712, %v722
    %v725 = vmul.f32 %v723, %v723
    %v726 = vmul.f32 %v724, %v724
    %v727 = vsel %vm60, %v725, 0.0
    %728 = vadd.xlane.f32.xlu0 %v727
    %v729 = vpop.xlane.xlu0 %728
    %v730 = vsel %vm60, %v726, 0.0
    %731 = vadd.xlane.f32.xlu0 %v730
    %v732 = vpop.xlane.xlu0 %731
    %v733 = vmul.f32 %v729, %v564
    %v734 = vmul.f32 %v732, %v564
    %v735 = vadd.f32 %v733, 1e-12
    %v736 = vadd.f32 %v734, 1e-12
    %v737 = vrsqrt.pop %v735
    %v738 = vmul.f32 %v737, %v735
    %v739 = vmul.f32 %v738, %v737
    %v740 = vmul.f32 0.5, %v739
    %v741 = vsub.f32 1.5, %v740
    %v742 = vmul.f32 %v737, %v741
    %vm743 = vweird.f32 %v735
    %vm744 = vweird.f32 %v737
    %vm745 = vmor %vm743, %vm744
    %v746 = vsel %vm745, %v737, %v742
    %v747 = vrsqrt.pop %v736
    %v748 = vmul.f32 %v747, %v736
    %v749 = vmul.f32 %v748, %v747
    %v750 = vmul.f32 0.5, %v749
    %v751 = vsub.f32 1.5, %v750
    %v752 = vmul.f32 %v747, %v751
    %vm753 = vweird.f32 %v736
    %vm754 = vweird.f32 %v747
    %vm755 = vmor %vm753, %vm754
    %v756 = vsel %vm755, %v747, %v752
    %v757 = vmul.f32 %v723, %v746
    %v758 = vmul.f32 %v724, %v756
    %v760 = vperm.slane %v713, 0
    %v762 = vmul.f32 %v757, %v760
    %v763 = vmul.f32 %v758, %v760
    %v765 = vperm.slane %v714, 0
    %v767 = vadd.f32 %v762, %v765
    %v768 = vadd.f32 %v763, %v765
    %769 = vst.msk [vmem:[#allocation3] sm:$0xff] %vm60, %v767
    %770 = vst.msk [vmem:[#allocation3 + $0x8] sm:$0xff] %vm60, %v768
    // Predicated region
    $region58: #{tpu_custom_call.1} parent=1 // pred_check
      _
    $region59: #{tpu_custom_call.1} parent=1 // pred_check_branch
      %772 = sbr.rel (0) target = $region61
    $region60: #{tpu_custom_call.1} parent=1 // pred_region
      %774 = vsyncadd [#allocation4], 0
      %s775 = sshll.u32 [#allocation3], 4
      %s776 = int_to_ptr.vmem [resolvable:$true] %s775
      %s777 = sshll.u32 %s14, 4
      %s778 = int_to_ptr.hbm [resolvable:$true] %s777
      %783 = dma.vmem_to_hbm [thread:$0]  %s776, 256, %s778, [#allocation4], 128, 128, 8
    $region61: #{tpu_custom_call.1} parent=1 // pred_fallthru
      _
    // Predicated region
    $region62: #{tpu_custom_call.1} parent=1 // pred_check
      _
    $region63: #{tpu_custom_call.1} parent=1 // pred_check_branch
      %785 = sbr.rel (0) target = $region65
    $region64: #{tpu_custom_call.1} parent=1 // pred_region
      %787 = dma.done [#allocation4], 256
    $region65: #{tpu_custom_call.1} parent=1 // pred_fallthru
      _
    %788 = vsyncpa [#allocation4], 1

</llo_original>
